<compile_context>
chip_gen: v7x
topology: tpu7x:2x2x1
jax: 0.10.0
libtpu: 0.0.40
codegen_flags: <defaults>
</compile_context>

<pallas_src>
import functools

import jax
import jax.numpy as jnp
import numpy as np
from jax.experimental import pallas as pl
from jax.experimental.pallas import tpu as pltpu


def _round_up(v, m):
    return (v + m - 1) // m * m


def _vmem_capacity_bytes():
    """Physical VMEM per core; conservative fallback if the query fails."""
    try:
        return int(pltpu.get_tpu_info().vmem_capacity_bytes)
    except Exception:
        return 64 * 2**20   # v7x per-TensorCore size; safe lower bound


def _conv_bn_silu_kernel(x_ref, w_ref, b_ref, o_ref, *,
                         kh, kw, cin_p, wp, l_tile, stride, n_rt,
                         per_tap, activate):
    """One (batch, Cout-tile, row-tile) grid step.

    x_ref: (1, Cin_p, F)     zero-padded, flattened image (resident whole image)
    w_ref: (TC, Cin_p*KH*KW) BN-folded weights, cols ordered (kh, kw, ci)
    b_ref: (TC, 1)           folded conv-bias + BN shift (f32)
    o_ref: (1, TC, l_tile)   lane-dense flat output tile
    """
    tc = o_ref.shape[1]

    if n_rt == 1:
        off = 0                                       # static fast path
    else:
        off = pl.multiple_of(pl.program_id(2) * (stride * l_tile), 128)

    def tap_slice(base):
        start = base + off
        if stride == 1:
            return x_ref[0, :, pl.ds(start, l_tile)]
        # TODO(synk): lane-strided read is slow; rework stride>1 in the wrapper.
        return x_ref[0, :, pl.ds(start, l_tile, stride)]

    if per_tap:
        # Large Cin: per-tap accumulation, no (K, L) concat copy.
        w = w_ref[...]
        acc = jnp.zeros((tc, l_tile), jnp.float32)
        for t_idx in range(kh * kw):
            i, j = divmod(t_idx, kw)
            a = tap_slice(i * wp + j)
            wt = w[:, t_idx * cin_p:(t_idx + 1) * cin_p]
            acc = acc + jnp.dot(wt, a, preferred_element_type=jnp.float32)
    else:
        # Small Cin: stack the KH*KW taps along the contraction axis, one GEMM.
        patches = [tap_slice(i * wp + j) for i in range(kh) for j in range(kw)]
        a = patches[0] if len(patches) == 1 else jnp.concatenate(patches, axis=0)
        acc = jnp.dot(w_ref[...], a, preferred_element_type=jnp.float32)

    y = acc + b_ref[...]                              # (TC,1) broadcast
    if activate:
        # SiLU: y * sigmoid(y) = y / (1 + exp(-y)); exp + approx recip -> EUP.
        y = y * pl.reciprocal(1.0 + jnp.exp(-y), approx=True)
    o_ref[...] = y[None, :, :].astype(o_ref.dtype)


@functools.partial(
    jax.jit,
    static_argnames=("stride", "pad", "compute_dtype", "out_dtype",
                     "activate", "bn"))
def conv_bn_silu(x, conv_w, conv_b, gamma, beta, run_mean, run_var,
                 *, stride=1, pad=1, eps=1e-5,
                 compute_dtype=jnp.bfloat16, out_dtype=None,
                 activate=True, bn=True):
    """x: (N, Cin, H, W) NCHW.  conv_w: (Cout, Cin, KH, KW).  Returns NCHW."""
    n, cin, h, w = x.shape
    cout, cin_w, kh, kw = conv_w.shape
    assert cin_w == cin, "grouped conv not supported"
    ho = (h + 2 * pad - kh) // stride + 1
    wo = (w + 2 * pad - kw) // stride + 1
    hp, wp = h + 2 * pad, w + 2 * pad

    cdt = jnp.dtype(compute_dtype) if compute_dtype is not None else jnp.dtype(x.dtype)
    odt = jnp.dtype(out_dtype) if out_dtype is not None else jnp.dtype(x.dtype)
    isz = cdt.itemsize

    # Cin padded to the sublane tile (8 for 32-bit, 16 for 16-bit operands).
    sub = 8 if isz >= 4 else (16 if isz == 2 else 32)
    cin_p = _round_up(cin, sub)
    k_p = cin_p * kh * kw

    # Cout tiling: whole (8-padded) Cout when small; 256-wide tiles otherwise.
    if cout <= 256:
        cout_p = _round_up(cout, 8)
        tc = cout_p
    else:
        cout_p = _round_up(cout, 256)
        tc = 256
    n_ct = cout_p // tc

    # ---- Fold BN (eval mode) + conv bias into per-channel scale & shift ----
    if conv_b is None:
        conv_b = jnp.zeros((cout,), jnp.float32)
    if bn:
        bn_scale = gamma * jax.lax.rsqrt(run_var + eps)            # (Cout,)
        shift = (conv_b - run_mean) * bn_scale + beta
    else:
        bn_scale = jnp.ones((cout,), jnp.float32)
        shift = conv_b
    w_folded = conv_w * bn_scale[:, None, None, None]              # (Cout,Cin,KH,KW)
    w_folded = jnp.pad(w_folded,
                       ((0, cout_p - cout), (0, cin_p - cin), (0, 0), (0, 0)))
    w_mat = jnp.transpose(w_folded, (0, 2, 3, 1)).reshape(cout_p, k_p).astype(cdt)
    bias = jnp.pad(shift, (0, cout_p - cout)).reshape(cout_p, 1).astype(jnp.float32)

    # ---- One cheap input prep pass: channel + spatial zero-pad, flatten ----
    xp = jnp.pad(x, ((0, 0), (0, cin_p - cin), (pad, pad), (pad, pad)))
    x_flat = xp.reshape(n, cin_p, hp * wp).astype(cdt)

    # ---- Output row tiling (lane-dense, 128-multiple tiles) + VMEM budget ----
    l_full = ho * wp
    per_tap = cin_p >= 128
    vmem_cap = _vmem_capacity_bytes()

    def plan(lt):
        nrt = (l_full + lt - 1) // lt
        f = max(hp * wp,
                stride * (nrt * lt - 1) + (kh - 1) * wp + (kw - 1) + 1)
        f = _round_up(f, 128)
        temps = ((cin_p if per_tap else k_p) * lt * isz   # tap slice / concat
                 + 2 * tc * lt * 4)                       # f32 acc + epilogue
        need = (2 * cin_p * f * isz                       # x (double-buffered)
                + 2 * tc * k_p * isz                      # weights
                + 2 * tc * 4                              # bias
                + 2 * tc * lt * odt.itemsize              # out
                + temps)
        return nrt, f, need

    l_tile = min(_round_up(l_full, 128), 1024)
    n_rt, f_len, need = plan(l_tile)
    while l_tile > 128 and need > int(0.8 * vmem_cap):
        l_tile -= 128
        n_rt, f_len, need = plan(l_tile)
    out_flat_dim = n_rt * l_tile

    if f_len > hp * wp:
        x_flat = jnp.pad(x_flat, ((0, 0), (0, 0), (0, f_len - hp * wp)))

    vmem_limit = int(min(0.8 * vmem_cap, max(16 * 2**20, int(1.25 * need))))

    # ---- Grid order: activation-resident (default) vs weight-resident ------
    if (n > 1) and (tc * k_p > cin_p * f_len):
        grid = (n_ct, n, n_rt)                     # deep layers: weights resident
        x_map = lambda c, b, r: (b, 0, 0)
        w_map = lambda c, b, r: (c, 0)
        bias_map = lambda c, b, r: (c, 0)
        o_map = lambda c, b, r: (b, c, r)
    else:
        grid = (n, n_ct, n_rt)                     # early layers: image resident
        x_map = lambda b, c, r: (b, 0, 0)
        w_map = lambda b, c, r: (c, 0)
        bias_map = lambda b, c, r: (c, 0)
        o_map = lambda b, c, r: (b, c, r)

    kernel = functools.partial(
        _conv_bn_silu_kernel, kh=kh, kw=kw, cin_p=cin_p, wp=wp,
        l_tile=l_tile, stride=stride, n_rt=n_rt, per_tap=per_tap,
        activate=activate)

    out_flat = pl.pallas_call(
        kernel,
        out_shape=jax.ShapeDtypeStruct((n, cout_p, out_flat_dim), odt),
        grid_spec=pltpu.PrefetchScalarGridSpec(
            num_scalar_prefetch=0,
            grid=grid,
            in_specs=[
                pl.BlockSpec((1, cin_p, f_len), x_map),
                pl.BlockSpec((tc, k_p), w_map),
                pl.BlockSpec((tc, 1), bias_map),
            ],
            out_specs=pl.BlockSpec((1, tc, l_tile), o_map),
        ),
        compiler_params=pltpu.CompilerParams(
            dimension_semantics=("parallel", "parallel", "parallel"),
            vmem_limit_bytes=vmem_limit),
    )(x_flat, w_mat, bias)

    # Free reshape + slices: drop channel padding, flat padding and junk cols.
    out = out_flat[:, :cout, :l_full].reshape(n, cout, ho, wp)[:, :, :, :wo]
    return out


def _reference(x, conv_w, conv_b, gamma, beta, run_mean, run_var,
               *, stride=1, pad=1, eps=1e-5):
    y = jax.lax.conv_general_dilated(
        x, conv_w, window_strides=(stride, stride),
        padding=[(pad, pad), (pad, pad)],
        dimension_numbers=("NCHW", "OIHW", "NCHW"))
    y = y + conv_b.reshape(1, -1, 1, 1)
    y = (y - run_mean.reshape(1, -1, 1, 1)) / jnp.sqrt(
        run_var.reshape(1, -1, 1, 1) + eps)
    y = y * gamma.reshape(1, -1, 1, 1) + beta.reshape(1, -1, 1, 1)
    return y * jax.nn.sigmoid(y)


if __name__ == "__main__":
    # ConvArgs (synthetic): in_channels=4, out_channels=8, kernel=3, stride=1, padding=1
    N, CIN, H, W = 2, 4, 16, 16
    COUT, KH, KW = 8, 3, 3

    key = jax.random.PRNGKey(0)
    kx, kwt, kb = jax.random.split(key, 3)
    x = jax.random.normal(kx, (N, CIN, H, W), dtype=jnp.float32)
    conv_w = jax.random.normal(kwt, (COUT, CIN, KH, KW), dtype=jnp.float32) * 0.1
    conv_b = jax.random.normal(kb, (COUT,), dtype=jnp.float32) * 0.1

    # Deterministic BN parameters (inference/folded).
    gamma = jnp.linspace(0.5, 1.5, COUT, dtype=jnp.float32)
    beta = jnp.linspace(-0.2, 0.2, COUT, dtype=jnp.float32)
    run_mean = jnp.linspace(-0.1, 0.1, COUT, dtype=jnp.float32)
    run_var = jnp.linspace(0.8, 1.2, COUT, dtype=jnp.float32)

    ref = _reference(x, conv_w, conv_b, gamma, beta, run_mean, run_var,
                     stride=1, pad=1)

    # f32 operands: closest to PyTorch numerics.
    out_f32 = conv_bn_silu(x, conv_w, conv_b, gamma, beta, run_mean, run_var,
                           stride=1, pad=1, compute_dtype=jnp.float32)
    out_f32 = jax.block_until_ready(out_f32)
    np.testing.assert_allclose(np.asarray(out_f32), np.asarray(ref),
                               rtol=1e-2, atol=2e-3)

    # Default path: bf16 operands on the MXU, f32 accumulation, f32 output.
    out_bf16 = conv_bn_silu(x, conv_w, conv_b, gamma, beta, run_mean, run_var,
                            stride=1, pad=1)
    out_bf16 = jax.block_until_ready(out_bf16)
    np.testing.assert_allclose(np.asarray(out_bf16), np.asarray(ref),
                               rtol=5e-2, atol=5e-2)

    print("KERNEL_OK")
</pallas_src>

<mosaic_0001>
module attributes {stable_mosaic.version = 11 : i64} {
  func.func @_conv_bn_silu_kernel(%arg0: i32, %arg1: i32, %arg2: i32, %arg3: memref<1x8x512xf32, #tpu.memory_space<vmem>>, %arg4: memref<8x72xf32, #tpu.memory_space<vmem>>, %arg5: memref<8x1xf32, #tpu.memory_space<vmem>>, %arg6: memref<1x8x384xf32, #tpu.memory_space<vmem>>) attributes {dimension_semantics = [#tpu.dimension_semantics<parallel>, #tpu.dimension_semantics<parallel>, #tpu.dimension_semantics<parallel>], iteration_bounds = array<i64: 2, 1, 1>, scalar_prefetch = 0 : i64, scratch_operands = 0 : i64, tpu.core_type = #tpu.core_type<tc>, window_params = [{transform_indices = @transform_0, window_bounds = array<i64: 1, 8, 512>}, {transform_indices = @transform_1, window_bounds = array<i64: 8, 72>}, {transform_indices = @transform_2, window_bounds = array<i64: 8, 1>}, {transform_indices = @transform_3, window_bounds = array<i64: 1, 8, 384>}]} {
    %c0 = arith.constant 0 : index
    %c0_0 = arith.constant 0 : index
    %c0_1 = arith.constant 0 : index
    %0 = vector.load %arg3[%c0, %c0_0, %c0_1] : memref<1x8x512xf32, #tpu.memory_space<vmem>>, vector<1x8x384xf32>
    %1 = vector.shape_cast %0 : vector<1x8x384xf32> to vector<8x384xf32>
    %c0_2 = arith.constant 0 : index
    %c0_3 = arith.constant 0 : index
    %c1 = arith.constant 1 : index
    %2 = vector.load %arg3[%c0_2, %c0_3, %c1] : memref<1x8x512xf32, #tpu.memory_space<vmem>>, vector<1x8x384xf32>
    %3 = vector.shape_cast %2 : vector<1x8x384xf32> to vector<8x384xf32>
    %c0_4 = arith.constant 0 : index
    %c0_5 = arith.constant 0 : index
    %c2 = arith.constant 2 : index
    %4 = vector.load %arg3[%c0_4, %c0_5, %c2] : memref<1x8x512xf32, #tpu.memory_space<vmem>>, vector<1x8x384xf32>
    %5 = vector.shape_cast %4 : vector<1x8x384xf32> to vector<8x384xf32>
    %c0_6 = arith.constant 0 : index
    %c0_7 = arith.constant 0 : index
    %c18 = arith.constant 18 : index
    %6 = vector.load %arg3[%c0_6, %c0_7, %c18] : memref<1x8x512xf32, #tpu.memory_space<vmem>>, vector<1x8x384xf32>
    %7 = vector.shape_cast %6 : vector<1x8x384xf32> to vector<8x384xf32>
    %c0_8 = arith.constant 0 : index
    %c0_9 = arith.constant 0 : index
    %c19 = arith.constant 19 : index
    %8 = vector.load %arg3[%c0_8, %c0_9, %c19] : memref<1x8x512xf32, #tpu.memory_space<vmem>>, vector<1x8x384xf32>
    %9 = vector.shape_cast %8 : vector<1x8x384xf32> to vector<8x384xf32>
    %c0_10 = arith.constant 0 : index
    %c0_11 = arith.constant 0 : index
    %c20 = arith.constant 20 : index
    %10 = vector.load %arg3[%c0_10, %c0_11, %c20] : memref<1x8x512xf32, #tpu.memory_space<vmem>>, vector<1x8x384xf32>
    %11 = vector.shape_cast %10 : vector<1x8x384xf32> to vector<8x384xf32>
    %c0_12 = arith.constant 0 : index
    %c0_13 = arith.constant 0 : index
    %c36 = arith.constant 36 : index
    %12 = vector.load %arg3[%c0_12, %c0_13, %c36] : memref<1x8x512xf32, #tpu.memory_space<vmem>>, vector<1x8x384xf32>
    %13 = vector.shape_cast %12 : vector<1x8x384xf32> to vector<8x384xf32>
    %c0_14 = arith.constant 0 : index
    %c0_15 = arith.constant 0 : index
    %c37 = arith.constant 37 : index
    %14 = vector.load %arg3[%c0_14, %c0_15, %c37] : memref<1x8x512xf32, #tpu.memory_space<vmem>>, vector<1x8x384xf32>
    %15 = vector.shape_cast %14 : vector<1x8x384xf32> to vector<8x384xf32>
    %c0_16 = arith.constant 0 : index
    %c0_17 = arith.constant 0 : index
    %c38 = arith.constant 38 : index
    %16 = vector.load %arg3[%c0_16, %c0_17, %c38] : memref<1x8x512xf32, #tpu.memory_space<vmem>>, vector<1x8x384xf32>
    %17 = vector.shape_cast %16 : vector<1x8x384xf32> to vector<8x384xf32>
    %18 = tpu.concatenate %1, %3, %5, %7, %9, %11, %13, %15, %17 in 0 : vector<8x384xf32>, vector<8x384xf32>, vector<8x384xf32>, vector<8x384xf32>, vector<8x384xf32>, vector<8x384xf32>, vector<8x384xf32>, vector<8x384xf32>, vector<8x384xf32> -> vector<72x384xf32>
    %c0_18 = arith.constant 0 : index
    %c0_19 = arith.constant 0 : index
    %19 = vector.load %arg4[%c0_18, %c0_19] : memref<8x72xf32, #tpu.memory_space<vmem>>, vector<8x72xf32>
    %cst = arith.constant dense<0.000000e+00> : vector<8x384xf32>
    %20 = tpu.matmul %19, %18, %cst {dimension_numbers = #tpu.dot_dimension_numbers<[1], [0], [0], [1], [0, 0, 1, 1], [], []>} : vector<8x72xf32>, vector<72x384xf32>, vector<8x384xf32> -> vector<8x384xf32>
    %c0_20 = arith.constant 0 : index
    %c0_21 = arith.constant 0 : index
    %21 = vector.load %arg5[%c0_20, %c0_21] : memref<8x1xf32, #tpu.memory_space<vmem>>, vector<8x1xf32>
    %22 = vector.broadcast %21 : vector<8x1xf32> to vector<8x384xf32>
    %23 = arith.addf %20, %22 : vector<8x384xf32>
    %cst_22 = arith.constant 0.000000e+00 : f32
    %24 = vector.broadcast %cst_22 : f32 to vector<8x384xf32>
    %25 = arith.subf %24, %23 : vector<8x384xf32>
    %26 = math.exp %25 : vector<8x384xf32>
    %cst_23 = arith.constant 1.000000e+00 : f32
    %27 = vector.broadcast %cst_23 : f32 to vector<8x384xf32>
    %28 = arith.addf %27, %26 : vector<8x384xf32>
    %29 = tpu.reciprocal %28 {approx = true} : vector<8x384xf32> -> vector<8x384xf32>
    %30 = arith.mulf %23, %29 : vector<8x384xf32>
    %31 = vector.shape_cast %30 : vector<8x384xf32> to vector<1x8x384xf32>
    %c0_24 = arith.constant 0 : index
    %c0_25 = arith.constant 0 : index
    %c0_26 = arith.constant 0 : index
    %32 = vector.load %arg6[%c0_24, %c0_25, %c0_26] : memref<1x8x384xf32, #tpu.memory_space<vmem>>, vector<1x8x384xf32>
    tpu.vector_store %arg6[%c0_24, %c0_25, %c0_26], %31 {strides = array<i32>} : memref<1x8x384xf32, #tpu.memory_space<vmem>>, vector<1x8x384xf32>,
    return
  }
  func.func @transform_0(%arg0: i32, %arg1: i32, %arg2: i32) -> (i32, i32, i32) {
    %c0_i32 = arith.constant 0 : i32
    %c0_i32_0 = arith.constant 0 : i32
    %c0_i32_1 = arith.constant 0 : i32
    return %arg0, %c0_i32, %c0_i32_0 : i32, i32, i32
  }
  func.func @transform_1(%arg0: i32, %arg1: i32, %arg2: i32) -> (i32, i32) {
    %c0_i32 = arith.constant 0 : i32
    %c0_i32_0 = arith.constant 0 : i32
    return %arg1, %c0_i32 : i32, i32
  }
  func.func @transform_2(%arg0: i32, %arg1: i32, %arg2: i32) -> (i32, i32) {
    %c0_i32 = arith.constant 0 : i32
    %c0_i32_0 = arith.constant 0 : i32
    return %arg1, %c0_i32 : i32, i32
  }
  func.func @transform_3(%arg0: i32, %arg1: i32, %arg2: i32) -> (i32, i32, i32) {
    %c0_i32 = arith.constant 0 : i32
    return %arg0, %arg1, %arg2 : i32, i32, i32
  }
}

</mosaic_0001>

<llo_original>
// kernel: conv_bn_silu.1
$region0: #{conv_bn_silu.1}
  #allocation0 [shape = 'u32[]', space=smem, size = 0x4, offset = 0x4, fixed_abs, tag = 'smem constant byte address 0x4 - core index']
  #allocation1 [shape = 'u32[144,128]{1,0:T(1,128)}', space=vmem, size = 0x12000, scoped, tag = 'internal scratch']
  %s0 = inlined_call_operand.vmem [shape: f32[2,8,512], index: 0, kind: input, shape index: {}]
  %s1 = inlined_call_operand.vmem [shape: f32[8,72], index: 1, kind: input, shape index: {}]
  %s2 = inlined_call_operand.vmem [shape: f32[8,1], index: 2, kind: input, shape index: {}]
  %s3 = inlined_call_operand.vmem [shape: f32[2,8,384], index: 3, kind: output, shape index: {}]
  %s4 = sld [smem:[#allocation0]]
  $region45: #{conv_bn_silu.1} parent=0
    _
  %s6 = ssub.s32 1, %s4
  %s7 = scalar_select 0, %s6, %s4
  loop: start=0, step=1, limit=4
  $region2: #{conv_bn_silu.1} parent=0 // loop_pre_header
    _
  $region3: #{conv_bn_silu.1} parent=0 // loop_header
    %s9 = sphi 0, %s13
    %p10 = scmp.ge.s32.totalorder %s9, 4
    %s16 = sphi 0, %s35
    %s17 = sphi 0, %s31
    %s18 = sphi 0, %s27
    %s19 = sphi 0, %s16
    %s20 = sphi 0, %s17
    %s21 = sphi 0, %s18
    %s22 = sphi 0, %s19
    %s23 = sphi 0, %s20
    %s24 = sphi 0, %s21
    %s38 = sphi 0, %s40
    %s41 = sphi 0, %s38
    %s42 = sphi 0, %s41
    %s58 = sphi 0, %s42
    %s64 = sphi 0, %s66
    %s67 = sphi 0, %s64
    %s68 = sphi 0, %s67
    %s84 = sphi 0, %s68
    %s90 = sphi 0, %s92
    %s93 = sphi 0, %s90
    %s94 = sphi 0, %s93
    %s110 = sphi 0, %s94
    %s120 = sphi 0, %s122
    %s123 = sphi 0, %s120
    %s124 = sphi 0, %s123
    %s140 = sphi 0, %s124
  $region4: #{conv_bn_silu.1} parent=0 // loop_header_branch
    %12 = sbr.rel (%p10) target = $region8
  $region5: #{conv_bn_silu.1} parent=0 // loop_body
    %s14 = ssub.s32 %s9, 1
    %s15 = ssub.s32 %s9, 2
    %s25 = sadd.s32 1, %s18
    %p26 = scmp.ge.s32.totalorder %s25, 1
    %s27 = scalar_select %p26, 0, %s25
    %s28 = sadd.s32 1, %s17
    %s29 = scalar_select %p26, %s28, %s17
    %p30 = scmp.ge.s32.totalorder %s29, 1
    %s31 = scalar_select %p30, 0, %s29
    %s32 = sadd.s32 1, %s16
    %s33 = scalar_select %p30, %s32, %s16
    %p34 = scmp.ge.s32.totalorder %s33, 2
    %s35 = scalar_select %p34, 0, %s33
    %s36 = ssub.s32 %s16, %s35
    %p37 = scmp.eq.s32.totalorder %s36, 0
    %s39 = sadd.s32 %s38, 1
    %s40 = scalar_select %p37, %s38, %s39
    %p43 = pneg %p37
    %p44 = scmp.eq.s32.totalorder %s9, 1
    %p45 = por %p43, %p44
    %p46 = scmp.ne.s32.totalorder %s38, %s41
    %p47 = scmp.eq.s32.totalorder %s9, 0
    %p48 = por %p46, %p47
    %p49 = scmp.ne.s32.totalorder %s38, %s41
    %p50 = scmp.eq.s32.totalorder %s14, 1
    %p51 = por %p49, %p50
    %p52 = scmp.ne.s32.totalorder %s41, %s42
    %p53 = scmp.eq.s32.totalorder %s14, 0
    %p54 = por %p52, %p53
    %p55 = scmp.ne.s32.totalorder %s41, %s42
    %p56 = scmp.eq.s32.totalorder %s15, 1
    %p57 = por %p55, %p56
    %p59 = scmp.ne.s32.totalorder %s42, %s58
    %p60 = scmp.eq.s32.totalorder %s15, 0
    %p61 = por %p59, %p60
    %s62 = ssub.s32 %s17, %s31
    %p63 = scmp.eq.s32.totalorder %s62, 0
    %s65 = sadd.s32 %s64, 1
    %s66 = scalar_select %p63, %s64, %s65
    %p69 = pneg %p63
    %p70 = scmp.eq.s32.totalorder %s9, 1
    %p71 = por %p69, %p70
    %p72 = scmp.ne.s32.totalorder %s64, %s67
    %p73 = scmp.eq.s32.totalorder %s9, 0
    %p74 = por %p72, %p73
    %p75 = scmp.ne.s32.totalorder %s64, %s67
    %p76 = scmp.eq.s32.totalorder %s14, 1
    %p77 = por %p75, %p76
    %p78 = scmp.ne.s32.totalorder %s67, %s68
    %p79 = scmp.eq.s32.totalorder %s14, 0
    %p80 = por %p78, %p79
    %p81 = scmp.ne.s32.totalorder %s67, %s68
    %p82 = scmp.eq.s32.totalorder %s15, 1
    %p83 = por %p81, %p82
    %p85 = scmp.ne.s32.totalorder %s68, %s84
    %p86 = scmp.eq.s32.totalorder %s15, 0
    %p87 = por %p85, %p86
    %s88 = ssub.s32 %s17, %s31
    %p89 = scmp.eq.s32.totalorder %s88, 0
    %s91 = sadd.s32 %s90, 1
    %s92 = scalar_select %p89, %s90, %s91
    %p95 = pneg %p89
    %p96 = scmp.eq.s32.totalorder %s9, 1
    %p97 = por %p95, %p96
    %p98 = scmp.ne.s32.totalorder %s90, %s93
    %p99 = scmp.eq.s32.totalorder %s9, 0
    %p100 = por %p98, %p99
    %p101 = scmp.ne.s32.totalorder %s90, %s93
    %p102 = scmp.eq.s32.totalorder %s14, 1
    %p103 = por %p101, %p102
    %p104 = scmp.ne.s32.totalorder %s93, %s94
    %p105 = scmp.eq.s32.totalorder %s14, 0
    %p106 = por %p104, %p105
    %p107 = scmp.ne.s32.totalorder %s93, %s94
    %p108 = scmp.eq.s32.totalorder %s15, 1
    %p109 = por %p107, %p108
    %p111 = scmp.ne.s32.totalorder %s94, %s110
    %p112 = scmp.eq.s32.totalorder %s15, 0
    %p113 = por %p111, %p112
    %s114 = ssub.s32 %s16, %s35
    %s115 = ssub.s32 %s17, %s31
    %s116 = sor.u32 %s114, %s115
    %s117 = ssub.s32 %s18, %s27
    %s118 = sor.u32 %s116, %s117
    %p119 = scmp.eq.s32.totalorder %s118, 0
    %s121 = sadd.s32 %s120, 1
    %s122 = scalar_select %p119, %s120, %s121
    %p125 = pneg %p119
    %p126 = scmp.eq.s32.totalorder %s9, 1
    %p127 = por %p125, %p126
    %p128 = scmp.ne.s32.totalorder %s120, %s123
    %p129 = scmp.eq.s32.totalorder %s9, 0
    %p130 = por %p128, %p129
    %p131 = scmp.ne.s32.totalorder %s120, %s123
    %p132 = scmp.eq.s32.totalorder %s14, 1
    %p133 = por %p131, %p132
    %p134 = scmp.ne.s32.totalorder %s123, %s124
    %p135 = scmp.eq.s32.totalorder %s14, 0
    %p136 = por %p134, %p135
    %p137 = scmp.ne.s32.totalorder %s123, %s124
    %p138 = scmp.eq.s32.totalorder %s15, 1
    %p139 = por %p137, %p138
    %p141 = scmp.ne.s32.totalorder %s124, %s140
    %p142 = scmp.eq.s32.totalorder %s15, 0
    %p143 = por %p141, %p142
    %p144 = scmp.le.s32.totalorder 1, %s9
    %p145 = scmp.lt.s32.totalorder %s9, 3
    %p146 = pnand %p144, %p145
    %p147 = pneg %p146
    // Predicated region
    $region9: #{conv_bn_silu.1} parent=5 // pred_check
      _
    $region10: #{conv_bn_silu.1} parent=5 // pred_check_branch
      %149 = sbr.rel (%p146) target = $region12
    $region11: #{conv_bn_silu.1} parent=5 // pred_region
      %s150 = ssub.s32 %s9, 1
      // Predicated region
      $region13: #{conv_bn_silu.1} parent=11 // pred_check
        %p151 = pneg %p80
      $region14: #{conv_bn_silu.1} parent=11 // pred_check_branch
        %153 = sbr.rel (%p151) target = $region16
      $region15: #{conv_bn_silu.1} parent=11 // pred_region
        %p154 = scmp.lt.s32.totalorder %s20, 0
        %s155 = scalar_select %p154, %s20, 0
        %s156 = smul.addr %s155, 8
        %s157 = scalar_lea.vmem %s1, %s156
      $region16: #{conv_bn_silu.1} parent=11 // pred_fallthru
        _
      // Predicated region
      $region17: #{conv_bn_silu.1} parent=11 // pred_check
        %p158 = pneg %p106
      $region18: #{conv_bn_silu.1} parent=11 // pred_check_branch
        %160 = sbr.rel (%p158) target = $region20
      $region19: #{conv_bn_silu.1} parent=11 // pred_region
        %p161 = scmp.lt.s32.totalorder %s20, 0
        %s162 = scalar_select %p161, %s20, 0
        %s163 = smul.addr %s162, 8
        %s164 = scalar_lea.vmem %s2, %s163
      $region20: #{conv_bn_silu.1} parent=11 // pred_fallthru
        _
    $region12: #{conv_bn_silu.1} parent=5 // pred_fallthru
      _
    %p165 = scmp.lt.s32.totalorder %s9, 2
    // Predicated region
    $region21: #{conv_bn_silu.1} parent=5 // pred_check
      %p166 = pneg %p165
    $region22: #{conv_bn_silu.1} parent=5 // pred_check_branch
      %168 = sbr.rel (%p166) target = $region24
    $region23: #{conv_bn_silu.1} parent=5 // pred_region
      // Predicated region
      $region25: #{conv_bn_silu.1} parent=23 // pred_check
        %p169 = pneg %p48
      $region26: #{conv_bn_silu.1} parent=23 // pred_check_branch
        %171 = sbr.rel (%p169) target = $region28
      $region27: #{conv_bn_silu.1} parent=23 // pred_region
        %p172 = scmp.lt.s32.totalorder %s16, 1
        %s173 = scalar_select %p172, %s16, 1
        %s174 = smul.addr %s173, 4
        %s175 = smul.addr %s174, 8
        %s176 = scalar_lea.vmem %s0, %s175
      $region28: #{conv_bn_silu.1} parent=23 // pred_fallthru
        _
    $region24: #{conv_bn_silu.1} parent=5 // pred_fallthru
      _
    %p177 = scmp.le.s32.totalorder 1, %s9
    %p178 = scmp.lt.s32.totalorder %s9, 3
    %p179 = pnand %p177, %p178
    %p180 = pneg %p179
    // Predicated region
    $region29: #{conv_bn_silu.1} parent=5 // pred_check
      _
    $region30: #{conv_bn_silu.1} parent=5 // pred_check_branch
      %182 = sbr.rel (%p179) target = $region32
    $region31: #{conv_bn_silu.1} parent=5 // pred_region
      %s183 = ssub.s32 %s9, 1
      %p184 = scmp.lt.s32.totalorder %s19, 1
      %s185 = scalar_select %p184, %s19, 1
      %s186 = smul.addr %s185, 4
      %s187 = smul.addr %s186, 8
      %s188 = scalar_lea.vmem %s0, %s187
      %p189 = pneg %p54
      %p190 = pneg %p51
      %p191 = scmp.lt.s32.totalorder %s20, 0
      %s192 = scalar_select %p191, %s20, 0
      %s193 = smul.addr %s192, 8
      %s194 = scalar_lea.vmem %s1, %s193
      %p195 = pneg %p80
      %p196 = pneg %p77
      %p197 = scmp.lt.s32.totalorder %s20, 0
      %s198 = scalar_select %p197, %s20, 0
      %s199 = smul.addr %s198, 8
      %s200 = scalar_lea.vmem %s2, %s199
      %p201 = pneg %p106
      %p202 = pneg %p103
      %p203 = pneg %p136
      %p204 = pneg %p133
      %s205 = smul.u32 3, %s21
      %p206 = scmp.lt.s32.totalorder %s19, 1
      %s207 = scalar_select %p206, %s19, 1
      %p208 = scmp.lt.s32.totalorder %s20, 0
      %s209 = scalar_select %p208, %s20, 0
      %p210 = scmp.lt.s32.totalorder %s205, 2
      %s211 = scalar_select %p210, %s205, 2
      %s212 = smul.addr %s209, 3
      %s213 = sadd.s32 %s211, %s212
      %s214 = smul.addr %s207, 3
      %s215 = sadd.s32 %s213, %s214
      %s216 = smul.addr %s215, 8
      %s217 = scalar_lea.vmem %s3, %s216
      %p218 = scmp.lt.s32.totalorder %s19, 1
      %s219 = scalar_select %p218, %s19, 1
      %s220 = smul.addr %s219, 4
      %s221 = smul.addr %s220, 8
      %s222 = scalar_lea.vmem %s0, %s221
      %p223 = scmp.lt.s32.totalorder %s20, 0
      %s224 = scalar_select %p223, %s20, 0
      %s225 = smul.addr %s224, 8
      %s226 = scalar_lea.vmem %s1, %s225
      %p227 = scmp.lt.s32.totalorder %s20, 0
      %s228 = scalar_select %p227, %s20, 0
      %s229 = smul.addr %s228, 8
      %s230 = scalar_lea.vmem %s2, %s229
      %s231 = smul.u32 3, %s21
      %p232 = scmp.lt.s32.totalorder %s19, 1
      %s233 = scalar_select %p232, %s19, 1
      %p234 = scmp.lt.s32.totalorder %s20, 0
      %s235 = scalar_select %p234, %s20, 0
      %p236 = scmp.lt.s32.totalorder %s231, 2
      %s237 = scalar_select %p236, %s231, 2
      %s238 = smul.addr %s235, 3
      %s239 = sadd.s32 %s237, %s238
      %s240 = smul.addr %s233, 3
      %s241 = sadd.s32 %s239, %s240
      %s242 = smul.addr %s241, 8
      %s243 = scalar_lea.vmem %s3, %s242
      %s244 = smul.u32 3, %s21
      %v245 = vld [vmem:[%s222] sm:$0xff]
      %v246 = vld [vmem:[%s222 + $0x8] sm:$0xff]
      %v247 = vld [vmem:[%s222 + $0x10] sm:$0xff]
      %v248 = vld [vmem:[%s222] sm:$0xff]
      %v249 = vld [vmem:[%s222 + $0x8] sm:$0xff]
      %v250 = vld [vmem:[%s222 + $0x10] sm:$0xff]
      %v251 = vld [vmem:[%s222 + $0x18] sm:$0xff]
      %256 = vrot.lane.b32.xlu0 %v248, 127
      %v257 = vpop.permute.xlu0 %256
      %258 = vrot.lane.b32.xlu0 %v249, 127
      %v259 = vpop.permute.xlu0 %258
      %260 = vrot.lane.b32.xlu0 %v250, 127
      %v261 = vpop.permute.xlu0 %260
      %262 = vrot.lane.b32.xlu0 %v251, 127
      %v263 = vpop.permute.xlu0 %262
      %vm264 = vcmask 1039360
      %v265 = vsel %vm264, %v257, %v259
      %v266 = vsel %vm264, %v259, %v261
      %v267 = vsel %vm264, %v261, %v263
      %271 = vrot.lane.b32.xlu0 %v248, 126
      %v272 = vpop.permute.xlu0 %271
      %273 = vrot.lane.b32.xlu0 %v249, 126
      %v274 = vpop.permute.xlu0 %273
      %275 = vrot.lane.b32.xlu0 %v250, 126
      %v276 = vpop.permute.xlu0 %275
      %277 = vrot.lane.b32.xlu0 %v251, 126
      %v278 = vpop.permute.xlu0 %277
      %vm279 = vcmask 1031168
      %v280 = vsel %vm279, %v272, %v274
      %v281 = vsel %vm279, %v274, %v276
      %v282 = vsel %vm279, %v276, %v278
      %286 = vrot.lane.b32.xlu0 %v248, 110
      %v287 = vpop.permute.xlu0 %286
      %288 = vrot.lane.b32.xlu0 %v249, 110
      %v289 = vpop.permute.xlu0 %288
      %290 = vrot.lane.b32.xlu0 %v250, 110
      %v291 = vpop.permute.xlu0 %290
      %292 = vrot.lane.b32.xlu0 %v251, 110
      %v293 = vpop.permute.xlu0 %292
      %vm294 = vcmask 900096
      %v295 = vsel %vm294, %v287, %v289
      %v296 = vsel %vm294, %v289, %v291
      %v297 = vsel %vm294, %v291, %v293
      %301 = vrot.lane.b32.xlu0 %v248, 109
      %v302 = vpop.permute.xlu0 %301
      %303 = vrot.lane.b32.xlu0 %v249, 109
      %v304 = vpop.permute.xlu0 %303
      %305 = vrot.lane.b32.xlu0 %v250, 109
      %v306 = vpop.permute.xlu0 %305
      %307 = vrot.lane.b32.xlu0 %v251, 109
      %v308 = vpop.permute.xlu0 %307
      %vm309 = vcmask 891904
      %v310 = vsel %vm309, %v302, %v304
      %v311 = vsel %vm309, %v304, %v306
      %v312 = vsel %vm309, %v306, %v308
      %316 = vrot.lane.b32.xlu0 %v248, 108
      %v317 = vpop.permute.xlu0 %316
      %318 = vrot.lane.b32.xlu0 %v249, 108
      %v319 = vpop.permute.xlu0 %318
      %320 = vrot.lane.b32.xlu0 %v250, 108
      %v321 = vpop.permute.xlu0 %320
      %322 = vrot.lane.b32.xlu0 %v251, 108
      %v323 = vpop.permute.xlu0 %322
      %vm324 = vcmask 883712
      %v325 = vsel %vm324, %v317, %v319
      %v326 = vsel %vm324, %v319, %v321
      %v327 = vsel %vm324, %v321, %v323
      %331 = vrot.lane.b32.xlu0 %v248, 92
      %v332 = vpop.permute.xlu0 %331
      %333 = vrot.lane.b32.xlu0 %v249, 92
      %v334 = vpop.permute.xlu0 %333
      %335 = vrot.lane.b32.xlu0 %v250, 92
      %v336 = vpop.permute.xlu0 %335
      %337 = vrot.lane.b32.xlu0 %v251, 92
      %v338 = vpop.permute.xlu0 %337
      %vm339 = vcmask 752640
      %v340 = vsel %vm339, %v332, %v334
      %v341 = vsel %vm339, %v334, %v336
      %v342 = vsel %vm339, %v336, %v338
      %346 = vrot.lane.b32.xlu0 %v248, 91
      %v347 = vpop.permute.xlu0 %346
      %348 = vrot.lane.b32.xlu0 %v249, 91
      %v349 = vpop.permute.xlu0 %348
      %350 = vrot.lane.b32.xlu0 %v250, 91
      %v351 = vpop.permute.xlu0 %350
      %352 = vrot.lane.b32.xlu0 %v251, 91
      %v353 = vpop.permute.xlu0 %352
      %vm354 = vcmask 744448
      %v355 = vsel %vm354, %v347, %v349
      %v356 = vsel %vm354, %v349, %v351
      %v357 = vsel %vm354, %v351, %v353
      %361 = vrot.lane.b32.xlu0 %v248, 90
      %v362 = vpop.permute.xlu0 %361
      %363 = vrot.lane.b32.xlu0 %v249, 90
      %v364 = vpop.permute.xlu0 %363
      %365 = vrot.lane.b32.xlu0 %v250, 90
      %v366 = vpop.permute.xlu0 %365
      %367 = vrot.lane.b32.xlu0 %v251, 90
      %v368 = vpop.permute.xlu0 %367
      %vm369 = vcmask 736256
      %v370 = vsel %vm369, %v362, %v364
      %v371 = vsel %vm369, %v364, %v366
      %v372 = vsel %vm369, %v366, %v368
      %v376 = vld [vmem:[%s226] sm:$0xff]
      %v377 = vld [vmem:[%s230] sm:$0xff]
      %379 = vset.pattern.permute.xlu0 0
      %380 = vperm.xlu0 %379, %v377
      %v381 = vpop.permute.xlu0 %380
      %vm383 = vcmask 588800
      %v385 = vsel %vm383, %v376, 0
      %387 = vmatprep.subr.mxu0 %v246
      %388 = vmatpush1.msra.mxu0 %v245
      %389 = vmatprep.subr.mxu0 %v266
      %390 = vmatpush1.msra.mxu0 %v265
      %391 = vmatprep.subr.mxu0 %v281
      %392 = vmatpush1.msra.mxu0 %v280
      %393 = vmatprep.subr.mxu0 %v296
      %394 = vmatpush1.msra.mxu0 %v295
      %395 = vmatprep.subr.mxu0 %v311
      %396 = vmatpush1.msra.mxu0 %v310
      %397 = vmatprep.subr.mxu0 %v326
      %398 = vmatpush1.msra.mxu0 %v325
      %399 = vmatprep.subr.mxu0 %v341
      %400 = vmatpush1.msra.mxu0 %v340
      %401 = vmatprep.subr.mxu0 %v356
      %402 = vmatpush1.msra.mxu0 %v355
      %403 = vmatprep.subr.mxu0 %v371
      %404 = vmatpush1.msra.mxu0 %v370
      %405 = vmatprep.subr.mxu0 0.0
      %406 = vmatpush1.msra.mxu0 0.0
      %407 = vmatprep.subr.mxu0 0.0
      %408 = vmatpush1.msra.mxu0 0.0
      %409 = vmatprep.subr.mxu0 0.0
      %410 = vmatpush1.msra.mxu0 0.0
      %411 = vmatprep.subr.mxu0 0.0
      %412 = vmatpush1.msra.mxu0 0.0
      %413 = vmatprep.subr.mxu0 0.0
      %414 = vmatpush1.msra.mxu0 0.0
      %415 = vmatprep.subr.mxu0 0.0
      %416 = vmatpush1.msra.mxu0 0.0
      %417 = vmatprep.subr.mxu0 0.0
      %418 = vmatpush1.msra.mxu0 0.0
      %419 = vmatprep.subr.mxu0 0.0
      %420 = vmatpush1.msra.mxu0 0.0
      %421 = vmatprep.subr.mxu0 0.0
      %422 = vmatpush1.msra.mxu0 0.0
      %423 = vmatprep.subr.mxu0 0.0
      %424 = vmatpush1.msra.mxu0 0.0
      %425 = vmatprep.subr.mxu0 0.0
      %426 = vmatpush1.msra.mxu0 0.0
      %427 = vmatprep.subr.mxu0 0.0
      %428 = vmatpush1.msra.mxu0 0.0
      %429 = vmatprep.subr.mxu0 0.0
      %430 = vmatpush1.msra.mxu0 0.0
      %431 = vmatprep.subr.mxu0 0.0
      %432 = vmatpush1.msra.mxu0 0.0
      %433 = vmatprep.subr.mxu0 0.0
      %434 = vmatpush1.msra.mxu0 0.0
      %435 = vmatprep.subr.mxu0 0.0
      %436 = vmatpush1.msra.mxu0 0.0
      %437 = vmatprep.subr.mxu0 0.0
      %438 = vmatpush1.msra.mxu0 0.0
      %439 = vmatprep.subr.mxu0 0.0
      %440 = vmatpush1.msra.mxu0 0.0
      %441 = vmatprep.subr.mxu0 0.0
      %442 = vmatpush1.msra.mxu0 0.0
      %443 = vmatprep.subr.mxu0 0.0
      %444 = vmatpush1.msra.mxu0 0.0
      %445 = vmatprep.subr.mxu0 0.0
      %446 = vmatpush1.msra.mxu0 0.0
      %447 = vmatprep.subr.mxu0 0.0
      %448 = vmatpush1.msra.mxu0 0.0
      %449 = vmatprep.subr.mxu0 0.0
      %450 = vmatpush1.msra.mxu0 0.0
      %451 = vmatprep.mubr.f32.mxu0 0.0
      %452 = vmatmul.mubr.f32.gmra.mrb[0].mxu0 %v385
      %v453 = vpop.f32.mrb[0].mxu0
      %v454 = vadd.f32 %v381, %v453
      %v455 = vpop.f32.mrb[0].mxu0
      %v456 = vadd.f32 %v381, %v455
      %457 = vdwg.mxu0
      %458 = vmatprep.subr.mxu0 0.0
      %459 = vmatpush1.msra.mxu0 %v247
      %460 = vmatprep.subr.mxu0 0.0
      %461 = vmatpush1.msra.mxu0 %v267
      %462 = vmatprep.subr.mxu0 0.0
      %463 = vmatpush1.msra.mxu0 %v282
      %464 = vmatprep.subr.mxu0 0.0
      %465 = vmatpush1.msra.mxu0 %v297
      %466 = vmatprep.subr.mxu0 0.0
      %467 = vmatpush1.msra.mxu0 %v312
      %468 = vmatprep.subr.mxu0 0.0
      %469 = vmatpush1.msra.mxu0 %v327
      %470 = vmatprep.subr.mxu0 0.0
      %471 = vmatpush1.msra.mxu0 %v342
      %472 = vmatprep.subr.mxu0 0.0
      %473 = vmatpush1.msra.mxu0 %v357
      %474 = vmatprep.subr.mxu0 0.0
      %475 = vmatpush1.msra.mxu0 %v372
      %476 = vmatprep.subr.mxu0 0.0
      %477 = vmatpush1.msra.mxu0 0.0
      %478 = vmatprep.subr.mxu0 0.0
      %479 = vmatpush1.msra.mxu0 0.0
      %480 = vmatprep.subr.mxu0 0.0
      %481 = vmatpush1.msra.mxu0 0.0
      %482 = vmatprep.subr.mxu0 0.0
      %483 = vmatpush1.msra.mxu0 0.0
      %484 = vmatprep.subr.mxu0 0.0
      %485 = vmatpush1.msra.mxu0 0.0
      %486 = vmatprep.subr.mxu0 0.0
      %487 = vmatpush1.msra.mxu0 0.0
      %488 = vmatprep.subr.mxu0 0.0
      %489 = vmatpush1.msra.mxu0 0.0
      %490 = vmatprep.subr.mxu0 0.0
      %491 = vmatpush1.msra.mxu0 0.0
      %492 = vmatprep.subr.mxu0 0.0
      %493 = vmatpush1.msra.mxu0 0.0
      %494 = vmatprep.subr.mxu0 0.0
      %495 = vmatpush1.msra.mxu0 0.0
      %496 = vmatprep.subr.mxu0 0.0
      %497 = vmatpush1.msra.mxu0 0.0
      %498 = vmatprep.subr.mxu0 0.0
      %499 = vmatpush1.msra.mxu0 0.0
      %500 = vmatprep.subr.mxu0 0.0
      %501 = vmatpush1.msra.mxu0 0.0
      %502 = vmatprep.subr.mxu0 0.0
      %503 = vmatpush1.msra.mxu0 0.0
      %504 = vmatprep.subr.mxu0 0.0
      %505 = vmatpush1.msra.mxu0 0.0
      %506 = vmatprep.subr.mxu0 0.0
      %507 = vmatpush1.msra.mxu0 0.0
      %508 = vmatprep.subr.mxu0 0.0
      %509 = vmatpush1.msra.mxu0 0.0
      %510 = vmatprep.subr.mxu0 0.0
      %511 = vmatpush1.msra.mxu0 0.0
      %512 = vmatprep.subr.mxu0 0.0
      %513 = vmatpush1.msra.mxu0 0.0
      %514 = vmatprep.subr.mxu0 0.0
      %515 = vmatpush1.msra.mxu0 0.0
      %516 = vmatprep.subr.mxu0 0.0
      %517 = vmatpush1.msra.mxu0 0.0
      %518 = vmatprep.subr.mxu0 0.0
      %519 = vmatpush1.msra.mxu0 0.0
      %520 = vmatprep.subr.mxu0 0.0
      %521 = vmatpush1.msra.mxu0 0.0
      %522 = vmatprep.mubr.f32.mxu0 0.0
      %523 = vmatmul.mubr.f32.gmra.mrb[0].mxu0 %v385
      %v524 = vpop.f32.mrb[0].mxu0
      %v525 = vadd.f32 %v381, %v524
      %v526 = vpop.f32.mrb[0].mxu0
      %527 = vdwg.mxu0
      %v528 = vsub.f32 0.0, %v454
      %v529 = vsub.f32 0.0, %v456
      %v530 = vsub.f32 0.0, %v525
      %v531 = vmul.f32 %v528, 1.442695
      %v532 = vpow.pop %v531
      %v533 = vmul.f32 %v529, 1.442695
      %v534 = vpow.pop %v533
      %v535 = vmul.f32 %v530, 1.442695
      %v536 = vpow.pop %v535
      %v537 = vadd.f32 %v532, 1.0
      %v538 = vadd.f32 %v534, 1.0
      %v539 = vadd.f32 %v536, 1.0
      %v540 = vrcp.pop %v537
      %v541 = vrcp.pop %v538
      %v542 = vrcp.pop %v539
      %v543 = vmul.f32 %v454, %v540
      %v544 = vmul.f32 %v456, %v541
      %v545 = vmul.f32 %v525, %v542
      %546 = vst [vmem:[%s243] sm:$0xff] %v543
      %547 = vst [vmem:[%s243 + $0x8] sm:$0xff] %v544
      %548 = vst [vmem:[%s243 + $0x10] sm:$0xff] %v545
      %s549 = smul.u32 3, %s21
      %p550 = scmp.lt.s32.totalorder %s19, 1
      %s551 = scalar_select %p550, %s19, 1
      %p552 = scmp.lt.s32.totalorder %s20, 0
      %s553 = scalar_select %p552, %s20, 0
      %p554 = scmp.lt.s32.totalorder %s549, 2
      %s555 = scalar_select %p554, %s549, 2
      %s556 = smul.addr %s553, 3
      %s557 = sadd.s32 %s555, %s556
      %s558 = smul.addr %s551, 3
      %s559 = sadd.s32 %s557, %s558
      %s560 = smul.addr %s559, 8
      %s561 = scalar_lea.vmem %s3, %s560
      // Predicated region
      $region33: #{conv_bn_silu.1} parent=31 // pred_check
        %p562 = pneg %p133
      $region34: #{conv_bn_silu.1} parent=31 // pred_check_branch
        %564 = sbr.rel (%p562) target = $region36
      $region35: #{conv_bn_silu.1} parent=31 // pred_region
        %s565 = smul.u32 3, %s21
      $region36: #{conv_bn_silu.1} parent=31 // pred_fallthru
        _
    $region32: #{conv_bn_silu.1} parent=5 // pred_fallthru
      _
    %p566 = scmp.le.s32.totalorder 2, %s9
    // Predicated region
    $region37: #{conv_bn_silu.1} parent=5 // pred_check
      %p567 = pneg %p566
    $region38: #{conv_bn_silu.1} parent=5 // pred_check_branch
      %569 = sbr.rel (%p567) target = $region40
    $region39: #{conv_bn_silu.1} parent=5 // pred_region
      %s570 = ssub.s32 %s9, 2
      // Predicated region
      $region41: #{conv_bn_silu.1} parent=39 // pred_check
        %p571 = pneg %p139
      $region42: #{conv_bn_silu.1} parent=39 // pred_check_branch
        %573 = sbr.rel (%p571) target = $region44
      $region43: #{conv_bn_silu.1} parent=39 // pred_region
        %s574 = smul.u32 3, %s24
        %p575 = scmp.lt.s32.totalorder %s22, 1
        %s576 = scalar_select %p575, %s22, 1
        %p577 = scmp.lt.s32.totalorder %s23, 0
        %s578 = scalar_select %p577, %s23, 0
        %p579 = scmp.lt.s32.totalorder %s574, 2
        %s580 = scalar_select %p579, %s574, 2
        %s581 = smul.addr %s578, 3
        %s582 = sadd.s32 %s580, %s581
        %s583 = smul.addr %s576, 3
        %s584 = sadd.s32 %s582, %s583
        %s585 = smul.addr %s584, 8
        %s586 = scalar_lea.vmem %s3, %s585
      $region44: #{conv_bn_silu.1} parent=39 // pred_fallthru
        _
    $region40: #{conv_bn_silu.1} parent=5 // pred_fallthru
      _
  $region6: #{conv_bn_silu.1} parent=0 // loop_footer
    %s13 = sadd.s32 1, %s9
  $region7: #{conv_bn_silu.1} parent=0 // loop_footer_branch
    %8 = sbr.rel target = $region3
  $region8: #{conv_bn_silu.1} parent=0 // loop_exit
    _

</llo_original>
